<compile_context>
chip_gen: v5e
topology: v5e:2x2
jax: 0.10.0
libtpu: 0.0.40
codegen_flags: <defaults>
</compile_context>

<pallas_src>
import functools
import math

import jax
import jax.numpy as jnp
from jax.experimental import pallas as pl
from jax.experimental.pallas import tpu as pltpu

_MIB = 1024 * 1024


def autopad(k, p=None):
    if p is None:
        p = k // 2 if isinstance(k, int) else [x // 2 for x in k]
    return p


def _vmem_budget_bytes():
    """Generation-aware scoped-VMEM budget.

    v7x has only 64 MiB of physical VMEM per TensorCore -> leave real headroom
    for compiler-internal scratch; v5e/v6e (128 MiB) can use much larger tiles.
    """
    try:
        cap = int(pltpu.get_tpu_info().vmem_capacity_bytes)
    except Exception:
        cap = 64 * _MIB                      # conservative (v7x-sized) fallback
    if cap <= 64 * _MIB:                     # v7x-class
        return min(cap - 12 * _MIB, 48 * _MIB)
    return min(cap - 24 * _MIB, 104 * _MIB)  # v5e / v6e (128 MiB physical)


# ---------------------------------------------------------------------------
# Kernels
# ---------------------------------------------------------------------------

def _gemm_bn_silu_kernel(cols_ref, w_ref, bias_ref, o_ref):
    """Small-C1 path.  cols_ref: (TR, K*K*C1) bf16; w_ref: (K*K*C1, C2p) bf16
    (BN scale pre-folded); bias_ref: (1, C2p) f32; o_ref: (TR, C2p)."""
    acc = jnp.dot(cols_ref[...], w_ref[...], preferred_element_type=jnp.float32)
    y = acc + bias_ref[0]
    # SiLU via a single tanh: sigmoid(y) = 0.5 * (1 + tanh(y / 2)).
    o_ref[...] = (y * (0.5 * jnp.tanh(0.5 * y) + 0.5)).astype(o_ref.dtype)


def _tap_conv_bn_silu_kernel(x_ref, w_ref, bias_ref, o_ref, *, K, S, TH, Wo):
    """Large-C1 path (one grid step = one (batch, output-row-tile) pair).

    x_ref:    (1, 1, TH_in, Wp, C1) bf16  halo'd NHWC input rows
    w_ref:    (K*K, C1, C2p)        bf16  per-tap weights (BN scale pre-folded)
    bias_ref: (1, C2p)              f32   folded BN bias
    o_ref:    (1, TH*Wo, C2p)             flat, lane-dense output tile
    """
    x = x_ref[0, 0]                                   # (TH_in, Wp, C1)
    c1 = x.shape[-1]
    acc = None
    for kh in range(K):
        for kw in range(K):
            patch = x[kh:kh + S * (TH - 1) + 1:S,
                      kw:kw + S * (Wo - 1) + 1:S, :]  # (TH, Wo, C1)
            part = jnp.dot(patch.reshape(TH * Wo, c1), w_ref[kh * K + kw],
                           preferred_element_type=jnp.float32)
            acc = part if acc is None else acc + part
    y = acc + bias_ref[0]
    o_ref[0] = (y * (0.5 * jnp.tanh(0.5 * y) + 0.5)).astype(o_ref.dtype)


# ---------------------------------------------------------------------------
# Wrapper paths
# ---------------------------------------------------------------------------

def _conv_gemm_path(x_padded, w_hwio, bias, n, c1, c2p, ho, wo, k, s,
                    out_dtype, budget):
    """C1 < 128: wrapper-side (kh,kw,c) packing, lane-dense GEMM kernel."""
    c2 = w_hwio.shape[-1]
    ckk = k * k * c1

    taps = []
    for kh in range(k):
        for kw in range(k):
            taps.append(x_padded[:, kh:kh + s * (ho - 1) + 1:s,
                                 kw:kw + s * (wo - 1) + 1:s, :])
    cols = jnp.concatenate(taps, axis=-1).reshape(n * ho * wo, ckk)   # bf16

    w_mat = jnp.pad(w_hwio.reshape(ckk, c2).astype(jnp.bfloat16),
                    ((0, 0), (0, c2p - c2)))

    rows = n * ho * wo
    out_bpe = jnp.dtype(out_dtype).itemsize
    # ~512 im2col rows per grid step (multiple of 8), but keep >= 2 grid steps
    # when possible (two v7x TensorCores) and fit the VMEM budget.
    tr = min(512, ((rows + 7) // 8) * 8)
    while rows > 8 and tr > 8 and pl.cdiv(rows, tr) < 2:
        tr = ((tr // 2 + 7) // 8) * 8

    def need(t):
        return (2 * (t * ckk * 2 + t * c2p * out_bpe)
                + ckk * c2p * 2 + t * c2p * 4 + c2p * 4)

    while tr > 8 and need(tr) > 0.8 * budget:
        tr = ((tr // 2 + 7) // 8) * 8

    rows_pad = pl.cdiv(rows, tr) * tr
    cols = jnp.pad(cols, ((0, rows_pad - rows), (0, 0)))

    out = pl.pallas_call(
        _gemm_bn_silu_kernel,
        out_shape=jax.ShapeDtypeStruct((rows_pad, c2p), out_dtype),
        grid_spec=pltpu.PrefetchScalarGridSpec(
            num_scalar_prefetch=0,
            grid=(rows_pad // tr,),
            in_specs=[
                pl.BlockSpec((tr, ckk), lambda i: (i, 0)),
                pl.BlockSpec((ckk, c2p), lambda i: (0, 0)),
                pl.BlockSpec((1, c2p), lambda i: (0, 0)),
            ],
            out_specs=pl.BlockSpec((tr, c2p), lambda i: (i, 0)),
        ),
        compiler_params=pltpu.CompilerParams(
            dimension_semantics=("parallel",),
            vmem_limit_bytes=int(budget)),
    )(cols, w_mat, bias)
    return out[:rows].reshape(n, ho, wo, c2p)


def _conv_tap_path(x_padded, w_hwio, bias, n, c1, c2p, ho, wo, k, s,
                   out_dtype, budget):
    """C1 >= 128: NHWC row tiles, K*K depth-C1 matmuls, no im2col scratch."""
    c2 = w_hwio.shape[-1]
    hp, wp = x_padded.shape[1], x_padded.shape[2]
    out_bpe = jnp.dtype(out_dtype).itemsize

    # Spatial row tile: ~512 im2col rows/step, halo <= ~1/8 of the tile, and
    # tile_h*wo a multiple of 8 so the flat output block is sublane-aligned.
    g = 8 // math.gcd(wo, 8)
    tile_h = max(1, min(ho, 512 // max(wo, 1)))
    if k > s:
        tile_h = max(tile_h, pl.cdiv(8 * (k - s), s))
    tile_h = min(tile_h, ho)
    tile_h = max(g, (tile_h // g) * g)

    def need(th):
        th_in_ = (th - 1) * s + k
        return (2 * (th_in_ * wp * c1 * 2 + th * wo * c2p * out_bpe)
                + k * k * c1 * c2p * 2 + 2 * th * wo * c2p * 4 + c2p * 4)

    while tile_h > g and need(tile_h) > 0.8 * budget:
        tile_h = max(g, ((tile_h // 2) // g) * g)

    n_th = pl.cdiv(ho, tile_h)
    th_in = (tile_h - 1) * s + k

    # Materialize halo'd row windows (BlockSpec blocks cannot overlap); with the
    # tile-size floor above the duplicated (k-s) rows are a small fraction.
    # TODO(synk): replace with pl.ANY + manual make_async_copy halo DMA to avoid
    # any HBM duplication when tiles are forced small by the VMEM budget.
    row_idx = (jnp.arange(n_th, dtype=jnp.int32)[:, None] * (tile_h * s)
               + jnp.arange(th_in, dtype=jnp.int32)[None, :])
    row_idx = jnp.clip(row_idx, 0, hp - 1)
    x_tiles = jnp.take(x_padded, row_idx, axis=1)     # (n, n_th, th_in, wp, c1)

    w_taps = jnp.pad(w_hwio.astype(jnp.bfloat16),
                     ((0, 0), (0, 0), (0, 0), (0, c2p - c2))
                     ).reshape(k * k, c1, c2p)

    kernel = functools.partial(_tap_conv_bn_silu_kernel,
                               K=k, S=s, TH=tile_h, Wo=wo)
    out = pl.pallas_call(
        kernel,
        out_shape=jax.ShapeDtypeStruct((n, n_th * tile_h * wo, c2p), out_dtype),
        grid_spec=pltpu.PrefetchScalarGridSpec(
            num_scalar_prefetch=0,
            grid=(n, n_th),
            in_specs=[
                pl.BlockSpec((1, 1, th_in, wp, c1), lambda b, t: (b, t, 0, 0, 0)),
                pl.BlockSpec((k * k, c1, c2p), lambda b, t: (0, 0, 0)),
                pl.BlockSpec((1, c2p), lambda b, t: (0, 0)),
            ],
            out_specs=pl.BlockSpec((1, tile_h * wo, c2p), lambda b, t: (b, t, 0)),
        ),
        compiler_params=pltpu.CompilerParams(
            dimension_semantics=("parallel", "parallel"),
            vmem_limit_bytes=int(budget)),
    )(x_tiles, w_taps, bias)
    return out.reshape(n, n_th * tile_h, wo, c2p)[:, :ho]


def conv_bn_silu(x_nchw, weight_oihw, gamma, beta, running_mean, running_var,
                 *, k=1, s=1, p=None, eps=1e-5):
    """Forward pass of `Conv` (groups=1, bias=False, act=SiLU), inference BN.

    x_nchw:      (N, C1, H, W)    weight_oihw: (C2, C1, K, K)
    returns:     (N, C2, Ho, Wo)
    """
    # TODO(synk): grouped conv (g > 1) is not implemented; g=1 only.
    p = autopad(k, p)
    n, c1, h, w = x_nchw.shape
    c2 = weight_oihw.shape[0]
    ho = (h + 2 * p - k) // s + 1
    wo = (w + 2 * p - k) // s + 1
    c2p = ((c2 + 127) // 128) * 128          # lane-dense output channels
    out_dtype = x_nchw.dtype                  # TODO(synk): emit bf16 if the consumer accepts it
    budget = _vmem_budget_bytes()

    # Inference BatchNorm folding: scale goes into the weights, bias stays in
    # the in-kernel epilogue.
    scale = (gamma.astype(jnp.float32)
             / jnp.sqrt(running_var.astype(jnp.float32) + eps))
    bias = beta.astype(jnp.float32) - running_mean.astype(jnp.float32) * scale
    bias = jnp.pad(bias, (0, c2p - c2)).reshape(1, c2p)

    w_hwio = jnp.transpose(weight_oihw, (2, 3, 1, 0)).astype(jnp.float32)
    w_hwio = w_hwio * scale[None, None, None, :]       # fold BN scale (pre-cast)

    x_nhwc = jnp.transpose(x_nchw, (0, 2, 3, 1)).astype(jnp.bfloat16)
    x_padded = jnp.pad(x_nhwc, ((0, 0), (p, p), (p, p), (0, 0)))

    if c1 < 128:
        out_nhwc = _conv_gemm_path(x_padded, w_hwio, bias, n, c1, c2p, ho, wo,
                                   k, s, out_dtype, budget)
    else:
        out_nhwc = _conv_tap_path(x_padded, w_hwio, bias, n, c1, c2p, ho, wo,
                                  k, s, out_dtype, budget)
    out_nhwc = out_nhwc[..., :c2]
    return jnp.transpose(out_nhwc, (0, 3, 1, 2))


def _reference(x_nchw, weight_oihw, gamma, beta, running_mean, running_var,
               *, k=3, s=1, p=None, eps=1e-5):
    """Pure-JAX f32 reference for the correctness check."""
    p = autopad(k, p)
    y = jax.lax.conv_general_dilated(
        x_nchw.astype(jnp.float32), weight_oihw.astype(jnp.float32),
        window_strides=(s, s), padding=((p, p), (p, p)),
        dimension_numbers=("NCHW", "OIHW", "NCHW"))
    scale = (gamma / jnp.sqrt(running_var + eps)).reshape(1, -1, 1, 1)
    bias = (beta - running_mean * scale.reshape(-1)).reshape(1, -1, 1, 1)
    y = y * scale + bias
    return y * jax.nn.sigmoid(y)


if __name__ == "__main__":
    def run_case(n, c1, c2, h, w, k, s, wstd, tol, key):
        kx, kw_, kg, kb, km, kv = jax.random.split(key, 6)
        x = jax.random.normal(kx, (n, c1, h, w), dtype=jnp.float32)
        weight = jax.random.normal(kw_, (c2, c1, k, k), dtype=jnp.float32) * wstd
        gamma = 1.0 + 0.1 * jax.random.normal(kg, (c2,), dtype=jnp.float32)
        beta = 0.1 * jax.random.normal(kb, (c2,), dtype=jnp.float32)
        mean = 0.1 * jax.random.normal(km, (c2,), dtype=jnp.float32)
        var = 1.0 + 0.1 * jax.random.uniform(kv, (c2,), dtype=jnp.float32)

        out = conv_bn_silu(x, weight, gamma, beta, mean, var, k=k, s=s)
        out = jax.block_until_ready(out)
        ref = _reference(x, weight, gamma, beta, mean, var, k=k, s=s)
        assert out.shape == ref.shape, (out.shape, ref.shape)
        max_err = float(jnp.max(jnp.abs(out - ref)))
        # bf16 MXU operands -> relaxed tolerance.
        assert jnp.allclose(out, ref, atol=tol, rtol=tol), max_err

    key = jax.random.PRNGKey(0)
    k1, k2 = jax.random.split(key)

    # Module config from the spec: Conv(c1=4, c2=8, k=3, s=1) -> autopad p=1.
    run_case(2, 4, 8, 16, 16, 3, 1, 0.1, 5e-2, k1)    # small-C1 GEMM path
    # Additional small check exercising the C1 >= 128 per-tap path.
    run_case(1, 128, 16, 8, 8, 3, 1, 0.05, 6e-2, k2)

    print("KERNEL_OK")
</pallas_src>

<mosaic_0001>
module attributes {stable_mosaic.version = 11 : i64} {
  func.func @_gemm_bn_silu_kernel(%arg0: i32, %arg1: memref<256x36xbf16, #tpu.memory_space<vmem>>, %arg2: memref<36x128xbf16, #tpu.memory_space<vmem>>, %arg3: memref<1x128xf32, #tpu.memory_space<vmem>>, %arg4: memref<256x128xf32, #tpu.memory_space<vmem>>) attributes {dimension_semantics = [#tpu.dimension_semantics<parallel>], iteration_bounds = array<i64: 2>, scalar_prefetch = 0 : i64, scratch_operands = 0 : i64, tpu.core_type = #tpu.core_type<tc>, window_params = [{transform_indices = @transform_0, window_bounds = array<i64: 256, 36>}, {pipeline_mode = #tpu.pipeline_mode<synchronous>, transform_indices = @transform_1, window_bounds = array<i64: 36, 128>}, {pipeline_mode = #tpu.pipeline_mode<synchronous>, transform_indices = @transform_2, window_bounds = array<i64: 1, 128>}, {transform_indices = @transform_3, window_bounds = array<i64: 256, 128>}]} {
    %c0 = arith.constant 0 : index
    %c0_0 = arith.constant 0 : index
    %0 = vector.load %arg1[%c0, %c0_0] : memref<256x36xbf16, #tpu.memory_space<vmem>>, vector<256x36xbf16>
    %c0_1 = arith.constant 0 : index
    %c0_2 = arith.constant 0 : index
    %1 = vector.load %arg2[%c0_1, %c0_2] : memref<36x128xbf16, #tpu.memory_space<vmem>>, vector<36x128xbf16>
    %cst = arith.constant dense<0.000000e+00> : vector<256x128xf32>
    %2 = tpu.matmul %0, %1, %cst {dimension_numbers = #tpu.dot_dimension_numbers<[1], [0], [0], [1], [0, 0, 1, 1], [], []>} : vector<256x36xbf16>, vector<36x128xbf16>, vector<256x128xf32> -> vector<256x128xf32>
    %c0_3 = arith.constant 0 : index
    %c0_4 = arith.constant 0 : index
    %3 = vector.load %arg3[%c0_3, %c0_4] : memref<1x128xf32, #tpu.memory_space<vmem>>, vector<1x128xf32>
    %4 = vector.shape_cast %3 : vector<1x128xf32> to vector<128xf32>
    %5 = vector.shape_cast %4 : vector<128xf32> to vector<1x128xf32>
    %6 = vector.broadcast %5 : vector<1x128xf32> to vector<256x128xf32>
    %7 = arith.addf %2, %6 : vector<256x128xf32>
    %cst_5 = arith.constant 5.000000e-01 : f32
    %8 = vector.broadcast %cst_5 : f32 to vector<256x128xf32>
    %9 = arith.mulf %8, %7 : vector<256x128xf32>
    %10 = math.tanh %9 : vector<256x128xf32>
    %cst_6 = arith.constant 5.000000e-01 : f32
    %11 = vector.broadcast %cst_6 : f32 to vector<256x128xf32>
    %12 = arith.mulf %11, %10 : vector<256x128xf32>
    %cst_7 = arith.constant 5.000000e-01 : f32
    %13 = vector.broadcast %cst_7 : f32 to vector<256x128xf32>
    %14 = arith.addf %12, %13 : vector<256x128xf32>
    %15 = arith.mulf %7, %14 : vector<256x128xf32>
    %c0_8 = arith.constant 0 : index
    %c0_9 = arith.constant 0 : index
    %16 = vector.load %arg4[%c0_8, %c0_9] : memref<256x128xf32, #tpu.memory_space<vmem>>, vector<256x128xf32>
    tpu.vector_store %arg4[%c0_8, %c0_9], %15 {strides = array<i32>} : memref<256x128xf32, #tpu.memory_space<vmem>>, vector<256x128xf32>,
    return
  }
  func.func @transform_0(%arg0: i32) -> (i32, i32) {
    %c0_i32 = arith.constant 0 : i32
    %c0_i32_0 = arith.constant 0 : i32
    return %arg0, %c0_i32 : i32, i32
  }
  func.func @transform_1(%arg0: i32) -> (i32, i32) {
    %c0_i32 = arith.constant 0 : i32
    %c0_i32_0 = arith.constant 0 : i32
    %c0_i32_1 = arith.constant 0 : i32
    return %c0_i32, %c0_i32_0 : i32, i32
  }
  func.func @transform_2(%arg0: i32) -> (i32, i32) {
    %c0_i32 = arith.constant 0 : i32
    %c0_i32_0 = arith.constant 0 : i32
    %c0_i32_1 = arith.constant 0 : i32
    return %c0_i32, %c0_i32_0 : i32, i32
  }
  func.func @transform_3(%arg0: i32) -> (i32, i32) {
    %c0_i32 = arith.constant 0 : i32
    %c0_i32_0 = arith.constant 0 : i32
    return %arg0, %c0_i32 : i32, i32
  }
}

</mosaic_0001>

<llo_original>
// kernel: tpu_custom_call.1
$region0: #{tpu_custom_call.1}
  #allocation0 [shape = 'u32[]', space=smem, size = 0x4, offset = 0x4, fixed_abs, tag = 'smem constant byte address 0x4 - core index']
  #allocation1 [shape = 'u32[72,128]{1,0:T(1,128)}', space=vmem, size = 0x9000, scoped, tag = 'internal scratch']
  %s0 = inlined_call_operand.vmem [shape: bf16[512,36], index: 0, kind: input, shape index: {}]
  %s1 = inlined_call_operand.vmem [shape: bf16[36,128], index: 1, kind: input, shape index: {}]
  %s2 = inlined_call_operand.vmem [shape: f32[1,128], index: 2, kind: input, shape index: {}]
  %s3 = inlined_call_operand.hbm [shape: f32[512,128], index: 3, kind: output, shape index: {}]
  %s4 = sld [smem:[#allocation0]]
  $region45: #{tpu_custom_call.1} parent=0
    _
  %s6 = ssub.s32 1, %s4
  %s7 = scalar_select 0, %s6, %s4
  $region1: #{tpu_custom_call.1} parent=0
    #allocation2 [shape = 'u8[262144]{0}', space=vmem, size = 0x40000, scoped, tag = 'output window, operand 0']
    #allocation3 [shape = 's32[2]{0}', space=sflag, size = 0x8, scoped, tag = 'scoped memory for tpu_custom_call.1']
    %8 = vsyncpa [#allocation3], 0
    %s9 = scalar_lea.sflag [#allocation3], 1
    %10 = vsyncpa %s9, 0
    loop: start=0, step=1, limit=4
    $region2: #{tpu_custom_call.1} parent=1 // loop_pre_header
      _
    $region3: #{tpu_custom_call.1} parent=1 // loop_header
      %s12 = sphi 0, %s16
      %p13 = scmp.ge.s32.totalorder %s12, 4
      %s22 = sphi 0, %s24
      %s25 = sphi 0, %s22
      %s26 = sphi 0, %s25
      %s42 = sphi 0, %s26
      %s46 = sphi 0, %s46
      %s48 = sphi 0, %s46
      %s49 = sphi 0, %s48
      %s63 = sphi 0, %s49
      %s67 = sphi 0, %s67
      %s69 = sphi 0, %s67
      %s70 = sphi 0, %s69
      %s84 = sphi 0, %s70
      %s90 = sphi 0, %s92
      %s93 = sphi 0, %s90
      %s94 = sphi 0, %s93
      %s110 = sphi 0, %s94
    $region4: #{tpu_custom_call.1} parent=1 // loop_header_branch
      %15 = sbr.rel (%p13) target = $region8
    $region5: #{tpu_custom_call.1} parent=1 // loop_body
      %s17 = ssub.s32 %s12, 1
      %s18 = ssub.s32 %s12, 2
      %s19 = sadd.s32 %s12, 1
      %s20 = ssub.s32 %s12, %s19
      %p21 = scmp.eq.s32.totalorder %s20, 0
      %s23 = sadd.s32 %s22, 1
      %s24 = scalar_select %p21, %s22, %s23
      %p27 = pneg %p21
      %p28 = scmp.eq.s32.totalorder %s12, 1
      %p29 = por %p27, %p28
      %p30 = scmp.ne.s32.totalorder %s22, %s25
      %p31 = scmp.eq.s32.totalorder %s12, 0
      %p32 = por %p30, %p31
      %p33 = scmp.ne.s32.totalorder %s22, %s25
      %p34 = scmp.eq.s32.totalorder %s17, 1
      %p35 = por %p33, %p34
      %p36 = scmp.ne.s32.totalorder %s25, %s26
      %p37 = scmp.eq.s32.totalorder %s17, 0
      %p38 = por %p36, %p37
      %p39 = scmp.ne.s32.totalorder %s25, %s26
      %p40 = scmp.eq.s32.totalorder %s18, 1
      %p41 = por %p39, %p40
      %p43 = scmp.ne.s32.totalorder %s26, %s42
      %p44 = scmp.eq.s32.totalorder %s18, 0
      %p45 = por %p43, %p44
      %s47 = sadd.s32 %s46, 1
      %p50 = scmp.eq.s32.totalorder %s12, 1
      %p51 = scmp.ne.s32.totalorder %s46, %s48
      %p52 = scmp.eq.s32.totalorder %s12, 0
      %p53 = por %p51, %p52
      %p54 = scmp.ne.s32.totalorder %s46, %s48
      %p55 = scmp.eq.s32.totalorder %s17, 1
      %p56 = por %p54, %p55
      %p57 = scmp.ne.s32.totalorder %s48, %s49
      %p58 = scmp.eq.s32.totalorder %s17, 0
      %p59 = por %p57, %p58
      %p60 = scmp.ne.s32.totalorder %s48, %s49
      %p61 = scmp.eq.s32.totalorder %s18, 1
      %p62 = por %p60, %p61
      %p64 = scmp.ne.s32.totalorder %s49, %s63
      %p65 = scmp.eq.s32.totalorder %s18, 0
      %p66 = por %p64, %p65
      %s68 = sadd.s32 %s67, 1
      %p71 = scmp.eq.s32.totalorder %s12, 1
      %p72 = scmp.ne.s32.totalorder %s67, %s69
      %p73 = scmp.eq.s32.totalorder %s12, 0
      %p74 = por %p72, %p73
      %p75 = scmp.ne.s32.totalorder %s67, %s69
      %p76 = scmp.eq.s32.totalorder %s17, 1
      %p77 = por %p75, %p76
      %p78 = scmp.ne.s32.totalorder %s69, %s70
      %p79 = scmp.eq.s32.totalorder %s17, 0
      %p80 = por %p78, %p79
      %p81 = scmp.ne.s32.totalorder %s69, %s70
      %p82 = scmp.eq.s32.totalorder %s18, 1
      %p83 = por %p81, %p82
      %p85 = scmp.ne.s32.totalorder %s70, %s84
      %p86 = scmp.eq.s32.totalorder %s18, 0
      %p87 = por %p85, %p86
      %s88 = ssub.s32 %s12, %s19
      %p89 = scmp.eq.s32.totalorder %s88, 0
      %s91 = sadd.s32 %s90, 1
      %s92 = scalar_select %p89, %s90, %s91
      %p95 = pneg %p89
      %p96 = scmp.eq.s32.totalorder %s12, 1
      %p97 = por %p95, %p96
      %p98 = scmp.ne.s32.totalorder %s90, %s93
      %p99 = scmp.eq.s32.totalorder %s12, 0
      %p100 = por %p98, %p99
      %p101 = scmp.ne.s32.totalorder %s90, %s93
      %p102 = scmp.eq.s32.totalorder %s17, 1
      %p103 = por %p101, %p102
      %p104 = scmp.ne.s32.totalorder %s93, %s94
      %p105 = scmp.eq.s32.totalorder %s17, 0
      %p106 = por %p104, %p105
      %p107 = scmp.ne.s32.totalorder %s93, %s94
      %p108 = scmp.eq.s32.totalorder %s18, 1
      %p109 = por %p107, %p108
      %p111 = scmp.ne.s32.totalorder %s94, %s110
      %p112 = scmp.eq.s32.totalorder %s18, 0
      %p113 = por %p111, %p112
      %p114 = scmp.le.s32.totalorder 1, %s12
      %p115 = scmp.lt.s32.totalorder %s12, 3
      %p116 = pnand %p114, %p115
      %p117 = pneg %p116
      // Predicated region
      $region9: #{tpu_custom_call.1} parent=5 // pred_check
        _
      $region10: #{tpu_custom_call.1} parent=5 // pred_check_branch
        %119 = sbr.rel (%p116) target = $region12
      $region11: #{tpu_custom_call.1} parent=5 // pred_region
        %s120 = ssub.s32 %s12, 1
        // Predicated region
        $region13: #{tpu_custom_call.1} parent=11 // pred_check
          %p121 = pneg %p59
        $region14: #{tpu_custom_call.1} parent=11 // pred_check_branch
          %123 = sbr.rel (%p121) target = $region16
        $region15: #{tpu_custom_call.1} parent=11 // pred_region
          _
        $region16: #{tpu_custom_call.1} parent=11 // pred_fallthru
          _
        // Predicated region
        $region17: #{tpu_custom_call.1} parent=11 // pred_check
          %p124 = pneg %p80
        $region18: #{tpu_custom_call.1} parent=11 // pred_check_branch
          %126 = sbr.rel (%p124) target = $region20
        $region19: #{tpu_custom_call.1} parent=11 // pred_region
          _
        $region20: #{tpu_custom_call.1} parent=11 // pred_fallthru
          _
      $region12: #{tpu_custom_call.1} parent=5 // pred_fallthru
        _
      %p127 = scmp.lt.s32.totalorder %s12, 2
      // Predicated region
      $region21: #{tpu_custom_call.1} parent=5 // pred_check
        %p128 = pneg %p127
      $region22: #{tpu_custom_call.1} parent=5 // pred_check_branch
        %130 = sbr.rel (%p128) target = $region24
      $region23: #{tpu_custom_call.1} parent=5 // pred_region
        // Predicated region
        $region25: #{tpu_custom_call.1} parent=23 // pred_check
          %p131 = pneg %p32
        $region26: #{tpu_custom_call.1} parent=23 // pred_check_branch
          %133 = sbr.rel (%p131) target = $region28
        $region27: #{tpu_custom_call.1} parent=23 // pred_region
          %s134 = smul.u32 32, %s12
          %p135 = scmp.lt.s32.totalorder %s134, 63
          %s136 = scalar_select %p135, %s134, 63
          %s137 = smul.addr %s136, 4
          %s138 = scalar_lea.vmem %s0, %s137
          %s139 = smul.u32 32, %s12
        $region28: #{tpu_custom_call.1} parent=23 // pred_fallthru
          _
      $region24: #{tpu_custom_call.1} parent=5 // pred_fallthru
        _
      %p140 = scmp.le.s32.totalorder 1, %s12
      %p141 = scmp.lt.s32.totalorder %s12, 3
      %p142 = pnand %p140, %p141
      %p143 = pneg %p142
      // Predicated region
      $region29: #{tpu_custom_call.1} parent=5 // pred_check
        _
      $region30: #{tpu_custom_call.1} parent=5 // pred_check_branch
        %145 = sbr.rel (%p142) target = $region32
      $region31: #{tpu_custom_call.1} parent=5 // pred_region
        %s146 = ssub.s32 %s12, 1
        %s147 = smul.u32 32, %s17
        %p148 = scmp.lt.s32.totalorder %s147, 63
        %s149 = scalar_select %p148, %s147, 63
        %s150 = smul.addr %s149, 4
        %s151 = scalar_lea.vmem %s0, %s150
        %p152 = pneg %p38
        %p153 = pneg %p35
        %p154 = pneg %p59
        %p155 = pneg %p56
        %p156 = pneg %p80
        %p157 = pneg %p77
        %p158 = pneg %p106
        %p159 = pneg %p103
        %s160 = sand.u32 %s93, 1
        %s161 = scalar_lea.sflag [#allocation3], %s160
        %s162 = sand.u32 %s93, 1
        %s163 = smul.addr %s162, 256
        %s164 = scalar_lea.vmem [#allocation2], %s163
        %s165 = smul.u32 32, %s17
        %p166 = scmp.lt.s32.totalorder %s165, 63
        %s167 = scalar_select %p166, %s165, 63
        %s168 = smul.addr %s167, 4
        %s169 = scalar_lea.vmem %s0, %s168
        %s170 = smul.u32 32, %s17
        %s171 = smul.u32 32, %s17
        %v173 = vld [vmem:[%s169] sm:$0xf]
        %v174 = vld [vmem:[%s169 + $0x4] sm:$0xf]
        %v175 = vld [vmem:[%s169 + $0x8] sm:$0xf]
        %v176 = vld [vmem:[%s169 + $0xc] sm:$0xf]
        %v177 = vld [vmem:[%s169 + $0x10] sm:$0xf]
        %v178 = vld [vmem:[%s169 + $0x14] sm:$0xf]
        %v179 = vld [vmem:[%s169 + $0x18] sm:$0xf]
        %v180 = vld [vmem:[%s169 + $0x1c] sm:$0xf]
        %v181 = vld [vmem:[%s169 + $0x20] sm:$0xf]
        %v182 = vld [vmem:[%s169 + $0x24] sm:$0xf]
        %v183 = vld [vmem:[%s169 + $0x28] sm:$0xf]
        %v184 = vld [vmem:[%s169 + $0x2c] sm:$0xf]
        %v185 = vld [vmem:[%s169 + $0x30] sm:$0xf]
        %v186 = vld [vmem:[%s169 + $0x34] sm:$0xf]
        %v187 = vld [vmem:[%s169 + $0x38] sm:$0xf]
        %v188 = vld [vmem:[%s169 + $0x3c] sm:$0xf]
        %v189 = vld [vmem:[%s169 + $0x40] sm:$0xf]
        %v190 = vld [vmem:[%s169 + $0x44] sm:$0xf]
        %v191 = vld [vmem:[%s169 + $0x48] sm:$0xf]
        %v192 = vld [vmem:[%s169 + $0x4c] sm:$0xf]
        %v193 = vld [vmem:[%s169 + $0x50] sm:$0xf]
        %v194 = vld [vmem:[%s169 + $0x54] sm:$0xf]
        %v195 = vld [vmem:[%s169 + $0x58] sm:$0xf]
        %v196 = vld [vmem:[%s169 + $0x5c] sm:$0xf]
        %v197 = vld [vmem:[%s169 + $0x60] sm:$0xf]
        %v198 = vld [vmem:[%s169 + $0x64] sm:$0xf]
        %v199 = vld [vmem:[%s169 + $0x68] sm:$0xf]
        %v200 = vld [vmem:[%s169 + $0x6c] sm:$0xf]
        %v201 = vld [vmem:[%s169 + $0x70] sm:$0xf]
        %v202 = vld [vmem:[%s169 + $0x74] sm:$0xf]
        %v203 = vld [vmem:[%s169 + $0x78] sm:$0xf]
        %v204 = vld [vmem:[%s169 + $0x7c] sm:$0xf]
        %v205 = vld [vmem:[%s1] sm:$0xf]
        %v206 = vld [vmem:[%s1 + $0x4] sm:$0xf]
        %v207 = vld [vmem:[%s1 + $0x8] sm:$0xf]
        %v208 = vld [vmem:[%s1 + $0xc] sm:$0xf]
        %v209 = vld [vmem:[%s1 + $0x10] sm:$0x3]
        %v210 = vld [vmem:[%s2] sm:$0x1]
        %v212 = vperm.slane %v210, 0
        %v246 = vunpack.c.l.b16 %v173
        %v247 = vunpack.c.l.b16 %v174
        %v248 = vunpack.c.l.b16 %v175
        %v249 = vunpack.c.l.b16 %v176
        %v250 = vunpack.c.l.b16 %v177
        %v251 = vunpack.c.l.b16 %v178
        %v252 = vunpack.c.l.b16 %v179
        %v253 = vunpack.c.l.b16 %v180
        %v254 = vunpack.c.l.b16 %v181
        %v255 = vunpack.c.l.b16 %v182
        %v256 = vunpack.c.l.b16 %v183
        %v257 = vunpack.c.l.b16 %v184
        %v258 = vunpack.c.l.b16 %v185
        %v259 = vunpack.c.l.b16 %v186
        %v260 = vunpack.c.l.b16 %v187
        %v261 = vunpack.c.l.b16 %v188
        %v262 = vunpack.c.l.b16 %v189
        %v263 = vunpack.c.l.b16 %v190
        %v264 = vunpack.c.l.b16 %v191
        %v265 = vunpack.c.l.b16 %v192
        %v266 = vunpack.c.l.b16 %v193
        %v267 = vunpack.c.l.b16 %v194
        %v268 = vunpack.c.l.b16 %v195
        %v269 = vunpack.c.l.b16 %v196
        %v270 = vunpack.c.l.b16 %v197
        %v271 = vunpack.c.l.b16 %v198
        %v272 = vunpack.c.l.b16 %v199
        %v273 = vunpack.c.l.b16 %v200
        %v274 = vunpack.c.l.b16 %v201
        %v275 = vunpack.c.l.b16 %v202
        %v276 = vunpack.c.l.b16 %v203
        %v277 = vunpack.c.l.b16 %v204
        %v278 = vpack.c.b16 %v247, %v246
        %v279 = vpack.c.b16 %v249, %v248
        %v280 = vpack.c.b16 %v251, %v250
        %v281 = vpack.c.b16 %v253, %v252
        %v282 = vpack.c.b16 %v255, %v254
        %v283 = vpack.c.b16 %v257, %v256
        %v284 = vpack.c.b16 %v259, %v258
        %v285 = vpack.c.b16 %v261, %v260
        %v286 = vpack.c.b16 %v263, %v262
        %v287 = vpack.c.b16 %v265, %v264
        %v288 = vpack.c.b16 %v267, %v266
        %v289 = vpack.c.b16 %v269, %v268
        %v290 = vpack.c.b16 %v271, %v270
        %v291 = vpack.c.b16 %v273, %v272
        %v292 = vpack.c.b16 %v275, %v274
        %v293 = vpack.c.b16 %v277, %v276
        %v299 = vunpack.c.l.b16 %v205
        %v300 = vunpack.c.l.b16 %v206
        %v301 = vunpack.c.l.b16 %v207
        %v302 = vunpack.c.l.b16 %v208
        %v303 = vunpack.c.l.b16 %v209
        %v304 = vpack.c.b16 %v300, %v299
        %v305 = vpack.c.b16 %v302, %v301
        %v306 = vpack.c.b16 %v303, %v303
        %vm309 = vcmask 293888
        %v311 = vsel %vm309, %v278, 0
        %v314 = vsel %vm309, %v279, 0
        %v317 = vsel %vm309, %v280, 0
        %v320 = vsel %vm309, %v281, 0
        %v323 = vsel %vm309, %v282, 0
        %v326 = vsel %vm309, %v283, 0
        %v329 = vsel %vm309, %v284, 0
        %v332 = vsel %vm309, %v285, 0
        %v335 = vsel %vm309, %v286, 0
        %v338 = vsel %vm309, %v287, 0
        %v341 = vsel %vm309, %v288, 0
        %v344 = vsel %vm309, %v289, 0
        %v347 = vsel %vm309, %v290, 0
        %v350 = vsel %vm309, %v291, 0
        %v353 = vsel %vm309, %v292, 0
        %v356 = vsel %vm309, %v293, 0
        %vm358 = vcmask 1041408
        %v360 = vsel %vm358, %v306, 0
        %362 = vmatpush.bf16.msra.mxu0 0
        %363 = vmatpush.bf16.msra.mxu0 0
        %364 = vmatpush.bf16.msra.mxu0 0
        %365 = vmatpush.bf16.msra.mxu0 0
        %366 = vmatpush.bf16.msra.mxu0 0
        %367 = vmatpush.bf16.msra.mxu0 %v360
        %368 = vmatpush.bf16.msra.mxu0 %v305
        %369 = vmatpush.bf16.msra.mxu0 %v304
        %370 = vmatmul.bf16.gmra.mxu0 %v311
        %v371 = vpop.f32.mrf.mxu0
        %v372 = vadd.f32 %v212, %v371
        %v373 = vpop.f32.mrf.mxu0
        %v374 = vadd.f32 %v212, %v373
        %375 = vmatmul.bf16.gmra.mxu0 %v314
        %v376 = vpop.f32.mrf.mxu0
        %v377 = vadd.f32 %v212, %v376
        %v378 = vpop.f32.mrf.mxu0
        %v379 = vadd.f32 %v212, %v378
        %380 = vmatmul.bf16.gmra.mxu0 %v317
        %v381 = vpop.f32.mrf.mxu0
        %v382 = vadd.f32 %v212, %v381
        %v383 = vpop.f32.mrf.mxu0
        %v384 = vadd.f32 %v212, %v383
        %385 = vmatmul.bf16.gmra.mxu0 %v320
        %v386 = vpop.f32.mrf.mxu0
        %v387 = vadd.f32 %v212, %v386
        %v388 = vpop.f32.mrf.mxu0
        %v389 = vadd.f32 %v212, %v388
        %390 = vmatmul.bf16.gmra.mxu0 %v323
        %v391 = vpop.f32.mrf.mxu0
        %v392 = vadd.f32 %v212, %v391
        %v393 = vpop.f32.mrf.mxu0
        %v394 = vadd.f32 %v212, %v393
        %395 = vmatmul.bf16.gmra.mxu0 %v326
        %v396 = vpop.f32.mrf.mxu0
        %v397 = vadd.f32 %v212, %v396
        %v398 = vpop.f32.mrf.mxu0
        %v399 = vadd.f32 %v212, %v398
        %400 = vmatmul.bf16.gmra.mxu0 %v329
        %v401 = vpop.f32.mrf.mxu0
        %v402 = vadd.f32 %v212, %v401
        %v403 = vpop.f32.mrf.mxu0
        %v404 = vadd.f32 %v212, %v403
        %405 = vmatmul.bf16.gmra.mxu0 %v332
        %v406 = vpop.f32.mrf.mxu0
        %v407 = vadd.f32 %v212, %v406
        %v408 = vpop.f32.mrf.mxu0
        %v409 = vadd.f32 %v212, %v408
        %410 = vmatmul.bf16.gmra.mxu0 %v335
        %v411 = vpop.f32.mrf.mxu0
        %v412 = vadd.f32 %v212, %v411
        %v413 = vpop.f32.mrf.mxu0
        %v414 = vadd.f32 %v212, %v413
        %415 = vmatmul.bf16.gmra.mxu0 %v338
        %v416 = vpop.f32.mrf.mxu0
        %v417 = vadd.f32 %v212, %v416
        %v418 = vpop.f32.mrf.mxu0
        %v419 = vadd.f32 %v212, %v418
        %420 = vmatmul.bf16.gmra.mxu0 %v341
        %v421 = vpop.f32.mrf.mxu0
        %v422 = vadd.f32 %v212, %v421
        %v423 = vpop.f32.mrf.mxu0
        %v424 = vadd.f32 %v212, %v423
        %425 = vmatmul.bf16.gmra.mxu0 %v344
        %v426 = vpop.f32.mrf.mxu0
        %v427 = vadd.f32 %v212, %v426
        %v428 = vpop.f32.mrf.mxu0
        %v429 = vadd.f32 %v212, %v428
        %430 = vmatmul.bf16.gmra.mxu0 %v347
        %v431 = vpop.f32.mrf.mxu0
        %v432 = vadd.f32 %v212, %v431
        %v433 = vpop.f32.mrf.mxu0
        %v434 = vadd.f32 %v212, %v433
        %435 = vmatmul.bf16.gmra.mxu0 %v350
        %v436 = vpop.f32.mrf.mxu0
        %v437 = vadd.f32 %v212, %v436
        %v438 = vpop.f32.mrf.mxu0
        %v439 = vadd.f32 %v212, %v438
        %440 = vmatmul.bf16.gmra.mxu0 %v353
        %v441 = vpop.f32.mrf.mxu0
        %v442 = vadd.f32 %v212, %v441
        %v443 = vpop.f32.mrf.mxu0
        %v444 = vadd.f32 %v212, %v443
        %445 = vmatmul.bf16.gmra.mxu0 %v356
        %v446 = vpop.f32.mrf.mxu0
        %v447 = vadd.f32 %v212, %v446
        %v448 = vpop.f32.mrf.mxu0
        %v449 = vadd.f32 %v212, %v448
        %450 = vdwg.mxu0
        %v451 = vmul.f32 %v372, 0.5
        %v452 = vmul.f32 %v374, 0.5
        %v453 = vmul.f32 %v377, 0.5
        %v454 = vmul.f32 %v379, 0.5
        %v455 = vmul.f32 %v382, 0.5
        %v456 = vmul.f32 %v384, 0.5
        %v457 = vmul.f32 %v387, 0.5
        %v458 = vmul.f32 %v389, 0.5
        %v459 = vmul.f32 %v392, 0.5
        %v460 = vmul.f32 %v394, 0.5
        %v461 = vmul.f32 %v397, 0.5
        %v462 = vmul.f32 %v399, 0.5
        %v463 = vmul.f32 %v402, 0.5
        %v464 = vmul.f32 %v404, 0.5
        %v465 = vmul.f32 %v407, 0.5
        %v466 = vmul.f32 %v409, 0.5
        %v467 = vmul.f32 %v412, 0.5
        %v468 = vmul.f32 %v414, 0.5
        %v469 = vmul.f32 %v417, 0.5
        %v470 = vmul.f32 %v419, 0.5
        %v471 = vmul.f32 %v422, 0.5
        %v472 = vmul.f32 %v424, 0.5
        %v473 = vmul.f32 %v427, 0.5
        %v474 = vmul.f32 %v429, 0.5
        %v475 = vmul.f32 %v432, 0.5
        %v476 = vmul.f32 %v434, 0.5
        %v477 = vmul.f32 %v437, 0.5
        %v478 = vmul.f32 %v439, 0.5
        %v479 = vmul.f32 %v442, 0.5
        %v480 = vmul.f32 %v444, 0.5
        %v481 = vmul.f32 %v447, 0.5
        %v482 = vmul.f32 %v449, 0.5
        %v483 = vtanh.pop %v451
        %v484 = vtanh.pop %v452
        %v485 = vtanh.pop %v453
        %v486 = vtanh.pop %v454
        %v487 = vtanh.pop %v455
        %v488 = vtanh.pop %v456
        %v489 = vtanh.pop %v457
        %v490 = vtanh.pop %v458
        %v491 = vtanh.pop %v459
        %v492 = vtanh.pop %v460
        %v493 = vtanh.pop %v461
        %v494 = vtanh.pop %v462
        %v495 = vtanh.pop %v463
        %v496 = vtanh.pop %v464
        %v497 = vtanh.pop %v465
        %v498 = vtanh.pop %v466
        %v499 = vtanh.pop %v467
        %v500 = vtanh.pop %v468
        %v501 = vtanh.pop %v469
        %v502 = vtanh.pop %v470
        %v503 = vtanh.pop %v471
        %v504 = vtanh.pop %v472
        %v505 = vtanh.pop %v473
        %v506 = vtanh.pop %v474
        %v507 = vtanh.pop %v475
        %v508 = vtanh.pop %v476
        %v509 = vtanh.pop %v477
        %v510 = vtanh.pop %v478
        %v511 = vtanh.pop %v479
        %v512 = vtanh.pop %v480
        %v513 = vtanh.pop %v481
        %v514 = vtanh.pop %v482
        %v515 = vmul.f32 %v483, 0.5
        %v516 = vmul.f32 %v484, 0.5
        %v517 = vmul.f32 %v485, 0.5
        %v518 = vmul.f32 %v486, 0.5
        %v519 = vmul.f32 %v487, 0.5
        %v520 = vmul.f32 %v488, 0.5
        %v521 = vmul.f32 %v489, 0.5
        %v522 = vmul.f32 %v490, 0.5
        %v523 = vmul.f32 %v491, 0.5
        %v524 = vmul.f32 %v492, 0.5
        %v525 = vmul.f32 %v493, 0.5
        %v526 = vmul.f32 %v494, 0.5
        %v527 = vmul.f32 %v495, 0.5
        %v528 = vmul.f32 %v496, 0.5
        %v529 = vmul.f32 %v497, 0.5
        %v530 = vmul.f32 %v498, 0.5
        %v531 = vmul.f32 %v499, 0.5
        %v532 = vmul.f32 %v500, 0.5
        %v533 = vmul.f32 %v501, 0.5
        %v534 = vmul.f32 %v502, 0.5
        %v535 = vmul.f32 %v503, 0.5
        %v536 = vmul.f32 %v504, 0.5
        %v537 = vmul.f32 %v505, 0.5
        %v538 = vmul.f32 %v506, 0.5
        %v539 = vmul.f32 %v507, 0.5
        %v540 = vmul.f32 %v508, 0.5
        %v541 = vmul.f32 %v509, 0.5
        %v542 = vmul.f32 %v510, 0.5
        %v543 = vmul.f32 %v511, 0.5
        %v544 = vmul.f32 %v512, 0.5
        %v545 = vmul.f32 %v513, 0.5
        %v546 = vmul.f32 %v514, 0.5
        %v547 = vadd.f32 %v515, 0.5
        %v548 = vadd.f32 %v516, 0.5
        %v549 = vadd.f32 %v517, 0.5
        %v550 = vadd.f32 %v518, 0.5
        %v551 = vadd.f32 %v519, 0.5
        %v552 = vadd.f32 %v520, 0.5
        %v553 = vadd.f32 %v521, 0.5
        %v554 = vadd.f32 %v522, 0.5
        %v555 = vadd.f32 %v523, 0.5
        %v556 = vadd.f32 %v524, 0.5
        %v557 = vadd.f32 %v525, 0.5
        %v558 = vadd.f32 %v526, 0.5
        %v559 = vadd.f32 %v527, 0.5
        %v560 = vadd.f32 %v528, 0.5
        %v561 = vadd.f32 %v529, 0.5
        %v562 = vadd.f32 %v530, 0.5
        %v563 = vadd.f32 %v531, 0.5
        %v564 = vadd.f32 %v532, 0.5
        %v565 = vadd.f32 %v533, 0.5
        %v566 = vadd.f32 %v534, 0.5
        %v567 = vadd.f32 %v535, 0.5
        %v568 = vadd.f32 %v536, 0.5
        %v569 = vadd.f32 %v537, 0.5
        %v570 = vadd.f32 %v538, 0.5
        %v571 = vadd.f32 %v539, 0.5
        %v572 = vadd.f32 %v540, 0.5
        %v573 = vadd.f32 %v541, 0.5
        %v574 = vadd.f32 %v542, 0.5
        %v575 = vadd.f32 %v543, 0.5
        %v576 = vadd.f32 %v544, 0.5
        %v577 = vadd.f32 %v545, 0.5
        %v578 = vadd.f32 %v546, 0.5
        %v579 = vmul.f32 %v372, %v547
        %v580 = vmul.f32 %v374, %v548
        %v581 = vmul.f32 %v377, %v549
        %v582 = vmul.f32 %v379, %v550
        %v583 = vmul.f32 %v382, %v551
        %v584 = vmul.f32 %v384, %v552
        %v585 = vmul.f32 %v387, %v553
        %v586 = vmul.f32 %v389, %v554
        %v587 = vmul.f32 %v392, %v555
        %v588 = vmul.f32 %v394, %v556
        %v589 = vmul.f32 %v397, %v557
        %v590 = vmul.f32 %v399, %v558
        %v591 = vmul.f32 %v402, %v559
        %v592 = vmul.f32 %v404, %v560
        %v593 = vmul.f32 %v407, %v561
        %v594 = vmul.f32 %v409, %v562
        %v595 = vmul.f32 %v412, %v563
        %v596 = vmul.f32 %v414, %v564
        %v597 = vmul.f32 %v417, %v565
        %v598 = vmul.f32 %v419, %v566
        %v599 = vmul.f32 %v422, %v567
        %v600 = vmul.f32 %v424, %v568
        %v601 = vmul.f32 %v427, %v569
        %v602 = vmul.f32 %v429, %v570
        %v603 = vmul.f32 %v432, %v571
        %v604 = vmul.f32 %v434, %v572
        %v605 = vmul.f32 %v437, %v573
        %v606 = vmul.f32 %v439, %v574
        %v607 = vmul.f32 %v442, %v575
        %v608 = vmul.f32 %v444, %v576
        %v609 = vmul.f32 %v447, %v577
        %v610 = vmul.f32 %v449, %v578
        %611 = vst [vmem:[%s164] sm:$0xff] %v579
        %612 = vst [vmem:[%s164 + $0x8] sm:$0xff] %v580
        %613 = vst [vmem:[%s164 + $0x10] sm:$0xff] %v581
        %614 = vst [vmem:[%s164 + $0x18] sm:$0xff] %v582
        %615 = vst [vmem:[%s164 + $0x20] sm:$0xff] %v583
        %616 = vst [vmem:[%s164 + $0x28] sm:$0xff] %v584
        %617 = vst [vmem:[%s164 + $0x30] sm:$0xff] %v585
        %618 = vst [vmem:[%s164 + $0x38] sm:$0xff] %v586
        %619 = vst [vmem:[%s164 + $0x40] sm:$0xff] %v587
        %620 = vst [vmem:[%s164 + $0x48] sm:$0xff] %v588
        %621 = vst [vmem:[%s164 + $0x50] sm:$0xff] %v589
        %622 = vst [vmem:[%s164 + $0x58] sm:$0xff] %v590
        %623 = vst [vmem:[%s164 + $0x60] sm:$0xff] %v591
        %624 = vst [vmem:[%s164 + $0x68] sm:$0xff] %v592
        %625 = vst [vmem:[%s164 + $0x70] sm:$0xff] %v593
        %626 = vst [vmem:[%s164 + $0x78] sm:$0xff] %v594
        %627 = vst [vmem:[%s164 + $0x80] sm:$0xff] %v595
        %628 = vst [vmem:[%s164 + $0x88] sm:$0xff] %v596
        %629 = vst [vmem:[%s164 + $0x90] sm:$0xff] %v597
        %630 = vst [vmem:[%s164 + $0x98] sm:$0xff] %v598
        %631 = vst [vmem:[%s164 + $0xa0] sm:$0xff] %v599
        %632 = vst [vmem:[%s164 + $0xa8] sm:$0xff] %v600
        %633 = vst [vmem:[%s164 + $0xb0] sm:$0xff] %v601
        %634 = vst [vmem:[%s164 + $0xb8] sm:$0xff] %v602
        %635 = vst [vmem:[%s164 + $0xc0] sm:$0xff] %v603
        %636 = vst [vmem:[%s164 + $0xc8] sm:$0xff] %v604
        %637 = vst [vmem:[%s164 + $0xd0] sm:$0xff] %v605
        %638 = vst [vmem:[%s164 + $0xd8] sm:$0xff] %v606
        %639 = vst [vmem:[%s164 + $0xe0] sm:$0xff] %v607
        %640 = vst [vmem:[%s164 + $0xe8] sm:$0xff] %v608
        %641 = vst [vmem:[%s164 + $0xf0] sm:$0xff] %v609
        %642 = vst [vmem:[%s164 + $0xf8] sm:$0xff] %v610
        %s643 = sand.u32 %s93, 1
        %s644 = scalar_lea.sflag [#allocation3], %s643
        %s645 = sand.u32 %s93, 1
        %s646 = smul.addr %s645, 256
        %s647 = scalar_lea.vmem [#allocation2], %s646
        // Predicated region
        $region33: #{tpu_custom_call.1} parent=31 // pred_check
          %p648 = pneg %p103
        $region34: #{tpu_custom_call.1} parent=31 // pred_check_branch
          %650 = sbr.rel (%p648) target = $region36
        $region35: #{tpu_custom_call.1} parent=31 // pred_region
          %s651 = smul.u32 32, %s17
          %653 = vsyncadd %s644, 0
          %s654 = smul.addr %s651, 8
          %s655 = scalar_lea.hbm %s3, %s654
          %s656 = sshll.u32 %s647, 4
          %s657 = int_to_ptr.vmem [resolvable:$true] %s656
          %s658 = sshll.u32 %s655, 4
          %s659 = int_to_ptr.hbm [resolvable:$true] %s658
          %664 = dma.vmem_to_hbm [thread:$0]  %s657, 4096, %s659, %s644, 128, 128, 8
        $region36: #{tpu_custom_call.1} parent=31 // pred_fallthru
          _
      $region32: #{tpu_custom_call.1} parent=5 // pred_fallthru
        _
      %p665 = scmp.le.s32.totalorder 2, %s12
      // Predicated region
      $region37: #{tpu_custom_call.1} parent=5 // pred_check
        %p666 = pneg %p665
      $region38: #{tpu_custom_call.1} parent=5 // pred_check_branch
        %668 = sbr.rel (%p666) target = $region40
      $region39: #{tpu_custom_call.1} parent=5 // pred_region
        %s669 = ssub.s32 %s12, 2
        // Predicated region
        $region41: #{tpu_custom_call.1} parent=39 // pred_check
          %p670 = pneg %p109
        $region42: #{tpu_custom_call.1} parent=39 // pred_check_branch
          %672 = sbr.rel (%p670) target = $region44
        $region43: #{tpu_custom_call.1} parent=39 // pred_region
          %s673 = sand.u32 %s94, 1
          %s674 = scalar_lea.sflag [#allocation3], %s673
          %s675 = sand.u32 %s94, 1
          %s676 = smul.addr %s675, 256
          %s677 = scalar_lea.vmem [#allocation2], %s676
          %679 = dma.done %s674, 4096
        $region44: #{tpu_custom_call.1} parent=39 // pred_fallthru
          _
      $region40: #{tpu_custom_call.1} parent=5 // pred_fallthru
        _
    $region6: #{tpu_custom_call.1} parent=1 // loop_footer
      %s16 = sadd.s32 1, %s12
    $region7: #{tpu_custom_call.1} parent=1 // loop_footer_branch
      %11 = sbr.rel target = $region3
    $region8: #{tpu_custom_call.1} parent=1 // loop_exit
      _
    %680 = vsyncpa [#allocation3], 1
    %s681 = scalar_lea.sflag [#allocation3], 1
    %682 = vsyncpa %s681, 1

</llo_original>
